<compile_context>
chip_gen: v7x
topology: tpu7x:2x2x1
jax: 0.10.0
libtpu: 0.0.40
codegen_flags: <defaults>
</compile_context>

<pallas_src>
import math
import numpy as np
import jax
import jax.numpy as jnp
from jax.experimental import pallas as pl
from jax.experimental.pallas import tpu as pltpu

D_MODEL = 32
MAX_SEQ_LEN = 200
SQRT_D = math.sqrt(D_MODEL)


def _build_pe_table(max_seq_len=MAX_SEQ_LEN, d_model=D_MODEL):
    """Exact formula of the reference module (cos term uses exponent 2*(i+1)/d_model)."""
    pos = np.arange(max_seq_len, dtype=np.float64)[:, None]        # (L, 1)
    i = np.arange(0, d_model, 2, dtype=np.float64)[None, :]        # (1, D/2), even indices
    pe = np.zeros((max_seq_len, d_model), np.float64)
    pe[:, 0::2] = np.sin(pos / 10000.0 ** (2.0 * i / d_model))
    pe[:, 1::2] = np.cos(pos / 10000.0 ** (2.0 * (i + 1.0) / d_model))
    return np.asarray(pe, np.float32)[None]                        # (1, L, D)


# Hoisted: computed once at import time (host numpy constant), never inside the forward.
PE_TABLE = _build_pe_table()


# ---------------------------------------------------------------- Pallas kernel
def _pos_encode_kernel(x_ref, pe_ref, o_ref):
    # out = x * sqrt(d_model) + pe     (pe's leading dim of 1 broadcasts over the
    # TB batch rows of the current block, entirely in VMEM/vregs)
    # TODO(synk): nn.Dropout(0.1) is stochastic train-time noise; modeled as identity
    # (eval/inference mode). For train parity add pltpu.prng_seed + prng_random_bits
    # masking with 1/(1-p) scaling.
    o_ref[...] = x_ref[...] * SQRT_D + pe_ref[...]


# ---------------------------------------------------------------- wrapper
def positional_encoder(x):
    """x: (B, S, D_MODEL) float32 -> (B, S, D_MODEL) float32."""
    B, S, D = x.shape
    assert D == D_MODEL and S <= MAX_SEQ_LEN
    pe = jnp.asarray(PE_TABLE[:, :S])                   # (1, S, D) — static constant slice

    # Batch tile: largest TB such that one x tile stays <= 2 MiB, so that the
    # double-buffered in + out tiles plus the resident pe tile sit comfortably
    # under the smallest default scoped-VMEM budget (16 MiB on v5e) and inside
    # v7x's 64 MiB physical VMEM.  For the demo shapes this gives TB == B.
    bytes_per_batch_row = S * D * 4
    TB = max(1, min(B, (2 << 20) // max(bytes_per_batch_row, 1)))
    grid = (pl.cdiv(B, TB),)

    out = pl.pallas_call(
        _pos_encode_kernel,
        out_shape=jax.ShapeDtypeStruct((B, S, D), jnp.float32),
        grid=grid,
        in_specs=[
            # x: last two block dims equal the full array dims (S, D) -> no (8,128)
            #    divisibility requirement, and no relayout reshape is needed.
            pl.BlockSpec((TB, S, D), lambda b: (b, 0, 0)),
            # pe: same block every grid step -> stays resident in VMEM.
            pl.BlockSpec((1, S, D), lambda b: (0, 0, 0)),
        ],
        out_specs=pl.BlockSpec((TB, S, D), lambda b: (b, 0, 0)),
        compiler_params=pltpu.CompilerParams(
            dimension_semantics=("parallel",),
        ),
        cost_estimate=pl.CostEstimate(
            flops=2 * B * S * D,
            bytes_accessed=(2 * B + 1) * S * D * 4,
            transcendentals=0,
        ),
    )(x, pe)
    return out


positional_encoder_jit = jax.jit(positional_encoder)


# ---------------------------------------------------------------- demo / self-check
if __name__ == "__main__":
    B, S = 2, 8
    key = jax.random.PRNGKey(0)
    x = jax.random.normal(key, (B, S, D_MODEL), jnp.float32)

    out = positional_encoder_jit(x)
    jax.block_until_ready(out)

    # pure-JAX reference (identical math)
    ref = x * SQRT_D + jnp.asarray(PE_TABLE[:, :S])
    assert out.shape == (B, S, D_MODEL)
    assert bool(jnp.all(jnp.isfinite(out)))
    assert bool(jnp.allclose(out, ref, atol=1e-5, rtol=1e-5))

    print("KERNEL_OK")
</pallas_src>

<mosaic_0001>
module attributes {stable_mosaic.version = 11 : i64} {
  func.func @_pos_encode_kernel(%arg0: i32, %arg1: memref<2x8x32xf32, #tpu.memory_space<vmem>>, %arg2: memref<1x8x32xf32, #tpu.memory_space<vmem>>, %arg3: memref<2x8x32xf32, #tpu.memory_space<vmem>>) attributes {dimension_semantics = [#tpu.dimension_semantics<parallel>], iteration_bounds = array<i64: 1>, scalar_prefetch = 0 : i64, scratch_operands = 0 : i64, tpu.core_type = #tpu.core_type<tc>, window_params = [{transform_indices = @transform_0, window_bounds = array<i64: 2, 8, 32>}, {pipeline_mode = #tpu.pipeline_mode<synchronous>, transform_indices = @transform_1, window_bounds = array<i64: 1, 8, 32>}, {transform_indices = @transform_2, window_bounds = array<i64: 2, 8, 32>}]} {
    %c0 = arith.constant 0 : index
    %c0_0 = arith.constant 0 : index
    %c0_1 = arith.constant 0 : index
    %0 = vector.load %arg1[%c0, %c0_0, %c0_1] : memref<2x8x32xf32, #tpu.memory_space<vmem>>, vector<2x8x32xf32>
    %cst = arith.constant 5.65685415 : f32
    %1 = vector.broadcast %cst : f32 to vector<2x8x32xf32>
    %2 = arith.mulf %0, %1 : vector<2x8x32xf32>
    %c0_2 = arith.constant 0 : index
    %c0_3 = arith.constant 0 : index
    %c0_4 = arith.constant 0 : index
    %3 = vector.load %arg2[%c0_2, %c0_3, %c0_4] : memref<1x8x32xf32, #tpu.memory_space<vmem>>, vector<1x8x32xf32>
    %4 = vector.broadcast %3 : vector<1x8x32xf32> to vector<2x8x32xf32>
    %5 = arith.addf %2, %4 : vector<2x8x32xf32>
    %c0_5 = arith.constant 0 : index
    %c0_6 = arith.constant 0 : index
    %c0_7 = arith.constant 0 : index
    %6 = vector.load %arg3[%c0_5, %c0_6, %c0_7] : memref<2x8x32xf32, #tpu.memory_space<vmem>>, vector<2x8x32xf32>
    tpu.vector_store %arg3[%c0_5, %c0_6, %c0_7], %5 {strides = array<i32>} : memref<2x8x32xf32, #tpu.memory_space<vmem>>, vector<2x8x32xf32>,
    return
  }
  func.func @transform_0(%arg0: i32) -> (i32, i32, i32) {
    %c0_i32 = arith.constant 0 : i32
    %c0_i32_0 = arith.constant 0 : i32
    %c0_i32_1 = arith.constant 0 : i32
    return %arg0, %c0_i32, %c0_i32_0 : i32, i32, i32
  }
  func.func @transform_1(%arg0: i32) -> (i32, i32, i32) {
    %c0_i32 = arith.constant 0 : i32
    %c0_i32_0 = arith.constant 0 : i32
    %c0_i32_1 = arith.constant 0 : i32
    %c0_i32_2 = arith.constant 0 : i32
    return %c0_i32, %c0_i32_0, %c0_i32_1 : i32, i32, i32
  }
  func.func @transform_2(%arg0: i32) -> (i32, i32, i32) {
    %c0_i32 = arith.constant 0 : i32
    %c0_i32_0 = arith.constant 0 : i32
    %c0_i32_1 = arith.constant 0 : i32
    return %arg0, %c0_i32, %c0_i32_0 : i32, i32, i32
  }
}

</mosaic_0001>

<llo_original>
// kernel: positional_encoder.1
$region0: #{positional_encoder.1}
  #allocation0 [shape = 'u32[]', space=smem, size = 0x4, offset = 0x4, fixed_abs, tag = 'smem constant byte address 0x4 - core index']
  #allocation1 [shape = 'u32[144,128]{1,0:T(1,128)}', space=vmem, size = 0x12000, scoped, tag = 'internal scratch']
  %s0 = inlined_call_operand.hbm [shape: f32[2,8,32], index: 0, kind: input, shape index: {}]
  %s1 = inlined_call_operand.hbm [shape: f32[1,8,32], index: 1, kind: input, shape index: {}]
  %s2 = inlined_call_operand.hbm [shape: f32[2,8,32], index: 2, kind: output, shape index: {}]
  %s3 = sld [smem:[#allocation0]]
  $region26: #{positional_encoder.1} parent=0
    _
  %s5 = ssub.s32 1, %s3
  %s6 = scalar_select 0, %s5, %s3
  $region1: #{positional_encoder.1} parent=0
    #allocation2 [shape = 'u8[8192]{0}', space=vmem, size = 0x2000, scoped, tag = 'input window, operand 0, single buffered']
    #allocation3 [shape = 's32[1]{0}', space=sflag, size = 0x4, scoped, tag = 'scoped memory for positional_encoder.1']
    #allocation4 [shape = 's32[1]{0}', space=sflag, size = 0x4, scoped, tag = 'scoped memory for positional_encoder.1']
    #allocation5 [shape = 'u8[4096]{0}', space=vmem, size = 0x1000, scoped, tag = 'input window, operand 1, single buffered']
    #allocation6 [shape = 's32[1]{0}', space=sflag, size = 0x4, scoped, tag = 'scoped memory for positional_encoder.1']
    #allocation7 [shape = 'u8[8192]{0}', space=vmem, size = 0x2000, scoped, tag = 'output window, operand 0, single buffered']
    %7 = vsyncpa [#allocation3], 0
    %8 = vsyncpa [#allocation6], 0
    %9 = vsyncpa [#allocation4], 0
    // Predicated region
    $region2: #{positional_encoder.1} parent=1 // pred_check
      _
    $region3: #{positional_encoder.1} parent=1 // pred_check_branch
      %11 = sbr.rel (0) target = $region5
    $region4: #{positional_encoder.1} parent=1 // pred_region
      %s13 = ssub.s32 256, 256
      %14 = vsyncadd [#allocation3], %s13
      %s15 = sshll.u32 [#allocation2], 4
      %s16 = int_to_ptr.vmem [resolvable:$true] %s15
      %21 = dma.hbm_to_vmem [thread:$0]  %s0, 256, %s16, [#allocation3], 128, 128, 8
    $region5: #{positional_encoder.1} parent=1 // pred_fallthru
      _
    // Predicated region
    $region6: #{positional_encoder.1} parent=1 // pred_check
      _
    $region7: #{positional_encoder.1} parent=1 // pred_check_branch
      %23 = sbr.rel (0) target = $region9
    $region8: #{positional_encoder.1} parent=1 // pred_region
      %s25 = ssub.s32 128, 128
      %26 = vsyncadd [#allocation6], %s25
      %s28 = sshll.u32 [#allocation5], 4
      %s29 = int_to_ptr.vmem [resolvable:$true] %s28
      %31 = dma.hbm_to_vmem [thread:$0]  %s1, 128, %s29, [#allocation6]
    $region9: #{positional_encoder.1} parent=1 // pred_fallthru
      _
    // Predicated region
    $region10: #{positional_encoder.1} parent=1 // pred_check
      _
    $region11: #{positional_encoder.1} parent=1 // pred_check_branch
      %33 = sbr.rel (0) target = $region13
    $region12: #{positional_encoder.1} parent=1 // pred_region
      %34 = dma.done [#allocation3], 256
    $region13: #{positional_encoder.1} parent=1 // pred_fallthru
      _
    // Predicated region
    $region14: #{positional_encoder.1} parent=1 // pred_check
      _
    $region15: #{positional_encoder.1} parent=1 // pred_check_branch
      %36 = sbr.rel (0) target = $region17
    $region16: #{positional_encoder.1} parent=1 // pred_region
      %37 = dma.done [#allocation6], 128
    $region17: #{positional_encoder.1} parent=1 // pred_fallthru
      _
    %v38 = vld [vmem:[#allocation2] sm:$0xff]
    %v39 = vld [vmem:[#allocation2 + $0x8] sm:$0xff]
    %v40 = vmul.f32 %v38, 5.656854
    %v41 = vmul.f32 %v39, 5.656854
    %v42 = vld [vmem:[#allocation5] sm:$0xff]
    %v43 = vadd.f32 %v40, %v42
    %v44 = vadd.f32 %v41, %v42
    %vm45 = vcmask 261120
    %46 = vst.msk [vmem:[#allocation7] sm:$0xff] %vm45, %v43
    %47 = vst.msk [vmem:[#allocation7 + $0x8] sm:$0xff] %vm45, %v44
    // Predicated region
    $region18: #{positional_encoder.1} parent=1 // pred_check
      _
    $region19: #{positional_encoder.1} parent=1 // pred_check_branch
      %49 = sbr.rel (0) target = $region21
    $region20: #{positional_encoder.1} parent=1 // pred_region
      %s51 = ssub.s32 256, 256
      %52 = vsyncadd [#allocation4], %s51
      %s53 = sshll.u32 [#allocation7], 4
      %s54 = int_to_ptr.vmem [resolvable:$true] %s53
      %59 = dma.vmem_to_hbm [thread:$0]  %s54, 256, %s2, [#allocation4], 128, 128, 8
    $region21: #{positional_encoder.1} parent=1 // pred_fallthru
      _
    // Predicated region
    $region22: #{positional_encoder.1} parent=1 // pred_check
      _
    $region23: #{positional_encoder.1} parent=1 // pred_check_branch
      %61 = sbr.rel (0) target = $region25
    $region24: #{positional_encoder.1} parent=1 // pred_region
      %62 = dma.done [#allocation4], 256
    $region25: #{positional_encoder.1} parent=1 // pred_fallthru
      _
    %63 = vsyncpa [#allocation3], 1
    %64 = vsyncpa [#allocation6], 1
    %65 = vsyncpa [#allocation4], 1

</llo_original>
